<compile_context>
chip_gen: v7x
topology: tpu7x:2x2x1
jax: 0.10.0
libtpu: 0.0.40
codegen_flags: <defaults>
</compile_context>

<pallas_src>
import math

import jax
import jax.numpy as jnp
from jax.experimental import pallas as pl
from jax.experimental.pallas import tpu as pltpu


# ---------------------------------------------------------------------------
# Kernel
# ---------------------------------------------------------------------------
def _sinusoidal_kernel(t_ref, f_ref, o_ref):
    # t_ref: (TB, 1) f32 time tile, f_ref: (1, half_dim) f32 precomputed freqs
    # (grid-resident), o_ref: (TB, 2*half_dim) output tile.
    emb = t_ref[...] * f_ref[...]                       # (TB, half_dim), VPU broadcast
    # One full-width, lane-dense store per tile (concat goes to the XLU slot)
    # instead of two masked vst.msk half-stores.
    out = jnp.concatenate([jnp.sin(emb), jnp.cos(emb)], axis=-1)
    o_ref[...] = out.astype(o_ref.dtype)


# ---------------------------------------------------------------------------
# Batch-tile selection (VMEM-budget + megacore aware)
# ---------------------------------------------------------------------------
_VMEM_BLOCK_BUDGET = 24 * 1024 * 1024   # double-buffered block budget, all gens
_VMEM_LIMIT_BYTES = 32 * 1024 * 1024    # scoped limit: < v7x 64 MiB physical, > v5e 16 MiB default
_SPLIT_B = 2048                         # above this, force >= 2 tiles (v7x dual-TC)


def _round_up_mult(x, m):
    return ((x + m - 1) // m) * m


def _pick_batch_tile(B, out_dim, block_b):
    # Per-row VMEM cost of the double-buffered pipeline:
    #   output block:            tb * out_dim * 4 bytes  x 2 buffers
    #   time block (tb, 1) pads to (tb, 128) lanes:  tb * 128 * 4 bytes x 2 buffers
    bytes_per_row = 2 * 4 * (out_dim + 128)
    budget_rows = max(8, (_VMEM_BLOCK_BUDGET // bytes_per_row) // 8 * 8)
    cap = min(block_b, budget_rows)
    if B <= cap:
        if B >= _SPLIT_B:
            # Whole batch fits one tile but is big: split in two so both v7x
            # TensorCores get work under dimension_semantics=("parallel",).
            return _round_up_mult((B + 1) // 2, 8)
        return B                        # single full-extent block: always layout-legal
    return max(8, (cap // 8) * 8)       # multiple of 8 (sublane constraint)


# ---------------------------------------------------------------------------
# Wrapper
# ---------------------------------------------------------------------------
def sinusoidal_position_embeddings(time, dim, *, block_b=4096,
                                   out_dtype=jnp.float32):
    """time: (B,) -> (B, 2*(dim//2)) sinusoidal embeddings (sin-half | cos-half)."""
    half_dim = dim // 2
    if half_dim < 2:
        # The module computes log(10000)/(half_dim - 1); dim < 4 divides by zero.
        raise ValueError("dim must be >= 4")
    out_dim = 2 * half_dim
    B = time.shape[0]

    scale = math.log(10000.0) / (half_dim - 1)
    # Literal module formula: exp(arange(half_dim)) * (-scale).  Precomputed
    # once on the host side; the kernel only does the mul + sin/cos.
    freqs = (jnp.exp(jnp.arange(half_dim, dtype=jnp.float32)) * (-scale)
             ).reshape(1, half_dim)

    time_2d = time.astype(jnp.float32).reshape(B, 1)

    tb = _pick_batch_tile(B, out_dim, block_b)
    grid = (pl.cdiv(B, tb),)

    cost = pl.CostEstimate(
        flops=int(B) * int(half_dim),                 # the t * freqs multiply
        transcendentals=int(B) * int(out_dim),        # one sin/cos per output elem
        bytes_accessed=4 * (int(B) * int(out_dim) + int(B) + int(half_dim)),
    )

    return pl.pallas_call(
        _sinusoidal_kernel,
        out_shape=jax.ShapeDtypeStruct((B, out_dim), out_dtype),
        grid=grid,
        in_specs=[
            pl.BlockSpec((tb, 1), lambda i: (i, 0)),         # batch-tiled time
            pl.BlockSpec((1, half_dim), lambda i: (0, 0)),   # VMEM-resident freqs
        ],
        out_specs=pl.BlockSpec((tb, out_dim), lambda i: (i, 0)),
        compiler_params=pltpu.CompilerParams(
            # Batch tiles are independent -> parallel (sharded across v7x's
            # two TensorCores; neutral on single-TC v5e/v6e).
            dimension_semantics=("parallel",),
            vmem_limit_bytes=_VMEM_LIMIT_BYTES,
        ),
        cost_estimate=cost,
    )(time_2d, freqs)


# ---------------------------------------------------------------------------
# Pure-JAX reference + self-test
# ---------------------------------------------------------------------------
def _reference(time, dim):
    half_dim = dim // 2
    scale = math.log(10000.0) / (half_dim - 1)
    freqs = jnp.exp(jnp.arange(half_dim, dtype=jnp.float32)) * (-scale)
    emb = time.astype(jnp.float32)[:, None] * freqs[None, :]
    return jnp.concatenate([jnp.sin(emb), jnp.cos(emb)], axis=-1)


if __name__ == "__main__":
    key = jax.random.PRNGKey(0)

    # --- Test 1: small dim, single tile ------------------------------------
    # time in [0, 1) keeps sin/cos arguments modest for the module's literal
    # exp(arange) formula at dim=8.
    B, dim = 8, 8
    time = jax.random.uniform(key, (B,), dtype=jnp.float32)
    out = jax.block_until_ready(sinusoidal_position_embeddings(time, dim))
    ref = _reference(time, dim)
    assert out.shape == (B, dim), out.shape
    assert out.dtype == jnp.float32, out.dtype
    assert jnp.allclose(out, ref, atol=1e-3, rtol=1e-3), float(
        jnp.max(jnp.abs(out - ref)))

    # --- Test 2: multi-tile (grid > 1) batch-tiled path ---------------------
    B2, dim2 = 32, 8
    time2 = jax.random.uniform(jax.random.PRNGKey(0), (B2,), dtype=jnp.float32)
    out2 = jax.block_until_ready(
        sinusoidal_position_embeddings(time2, dim2, block_b=8))
    ref2 = _reference(time2, dim2)
    assert out2.shape == (B2, dim2), out2.shape
    assert jnp.allclose(out2, ref2, atol=1e-3, rtol=1e-3), float(
        jnp.max(jnp.abs(out2 - ref2)))

    # --- Test 3: realistic dim=128 (lane-dense 128-wide output store) -------
    # With the module's literal formula freqs[k] ~ exp(k); scale time by 1e-26
    # so every sin/cos argument stays O(1) and numerics are well-conditioned.
    B3, dim3 = 16, 128
    time3 = jax.random.uniform(jax.random.PRNGKey(0), (B3,), dtype=jnp.float32) * 1e-26
    out3 = jax.block_until_ready(sinusoidal_position_embeddings(time3, dim3))
    ref3 = _reference(time3, dim3)
    assert out3.shape == (B3, dim3), out3.shape
    assert jnp.allclose(out3, ref3, atol=1e-3, rtol=1e-3), float(
        jnp.max(jnp.abs(out3 - ref3)))

    print("KERNEL_OK")
</pallas_src>

<mosaic_0001>
module attributes {stable_mosaic.version = 11 : i64} {
  func.func @_sinusoidal_kernel(%arg0: i32, %arg1: memref<8x1xf32, #tpu.memory_space<vmem>>, %arg2: memref<1x4xf32, #tpu.memory_space<vmem>>, %arg3: memref<8x8xf32, #tpu.memory_space<vmem>>) attributes {dimension_semantics = [#tpu.dimension_semantics<parallel>], iteration_bounds = array<i64: 1>, scalar_prefetch = 0 : i64, scratch_operands = 0 : i64, tpu.core_type = #tpu.core_type<tc>, window_params = [{transform_indices = @transform_0, window_bounds = array<i64: 8, 1>}, {pipeline_mode = #tpu.pipeline_mode<synchronous>, transform_indices = @transform_1, window_bounds = array<i64: 1, 4>}, {transform_indices = @transform_2, window_bounds = array<i64: 8, 8>}]} {
    %c0 = arith.constant 0 : index
    %c0_0 = arith.constant 0 : index
    %0 = vector.load %arg1[%c0, %c0_0] : memref<8x1xf32, #tpu.memory_space<vmem>>, vector<8x1xf32>
    %c0_1 = arith.constant 0 : index
    %c0_2 = arith.constant 0 : index
    %1 = vector.load %arg2[%c0_1, %c0_2] : memref<1x4xf32, #tpu.memory_space<vmem>>, vector<1x4xf32>
    %2 = vector.broadcast %0 : vector<8x1xf32> to vector<8x4xf32>
    %3 = vector.broadcast %1 : vector<1x4xf32> to vector<8x4xf32>
    %4 = arith.mulf %2, %3 : vector<8x4xf32>
    %5 = math.sin %4 : vector<8x4xf32>
    %6 = math.cos %4 : vector<8x4xf32>
    %7 = tpu.concatenate %5, %6 in 1 : vector<8x4xf32>, vector<8x4xf32> -> vector<8x8xf32>
    %c0_3 = arith.constant 0 : index
    %c0_4 = arith.constant 0 : index
    %8 = vector.load %arg3[%c0_3, %c0_4] : memref<8x8xf32, #tpu.memory_space<vmem>>, vector<8x8xf32>
    tpu.vector_store %arg3[%c0_3, %c0_4], %7 {strides = array<i32>} : memref<8x8xf32, #tpu.memory_space<vmem>>, vector<8x8xf32>,
    return
  }
  func.func @transform_0(%arg0: i32) -> (i32, i32) {
    %c0_i32 = arith.constant 0 : i32
    %c0_i32_0 = arith.constant 0 : i32
    return %arg0, %c0_i32 : i32, i32
  }
  func.func @transform_1(%arg0: i32) -> (i32, i32) {
    %c0_i32 = arith.constant 0 : i32
    %c0_i32_0 = arith.constant 0 : i32
    %c0_i32_1 = arith.constant 0 : i32
    return %c0_i32, %c0_i32_0 : i32, i32
  }
  func.func @transform_2(%arg0: i32) -> (i32, i32) {
    %c0_i32 = arith.constant 0 : i32
    %c0_i32_0 = arith.constant 0 : i32
    return %arg0, %c0_i32 : i32, i32
  }
}

</mosaic_0001>

<llo_original>
// kernel: tpu_custom_call.1
$region0: #{tpu_custom_call.1}
  #allocation0 [shape = 'u32[]', space=smem, size = 0x4, offset = 0x4, fixed_abs, tag = 'smem constant byte address 0x4 - core index']
  #allocation1 [shape = 'u32[144,128]{1,0:T(1,128)}', space=vmem, size = 0x12000, scoped, tag = 'internal scratch']
  %s0 = inlined_call_operand.vmem [shape: f32[8,1], index: 0, kind: input, shape index: {}]
  %s1 = inlined_call_operand.vmem [shape: f32[1,4], index: 1, kind: input, shape index: {}]
  %s2 = inlined_call_operand.hbm [shape: f32[8,8], index: 2, kind: output, shape index: {}]
  %s3 = sld [smem:[#allocation0]]
  $region18: #{tpu_custom_call.1} parent=0
    _
  %s5 = ssub.s32 1, %s3
  %s6 = scalar_select 0, %s5, %s3
  $region1: #{tpu_custom_call.1} parent=0
    #allocation2 [shape = 'u8[4096]{0}', space=vmem, size = 0x1000, scoped, tag = 'output window, operand 0, single buffered']
    #allocation3 [shape = 's32[1]{0}', space=sflag, size = 0x4, scoped, tag = 'scoped memory for tpu_custom_call.1']
    %7 = vsyncpa [#allocation3], 0
    // Predicated region
    $region2: #{tpu_custom_call.1} parent=1 // pred_check
      _
    $region3: #{tpu_custom_call.1} parent=1 // pred_check_branch
      %9 = sbr.rel (0) target = $region5
    $region4: #{tpu_custom_call.1} parent=1 // pred_region
      _
    $region5: #{tpu_custom_call.1} parent=1 // pred_fallthru
      _
    // Predicated region
    $region6: #{tpu_custom_call.1} parent=1 // pred_check
      _
    $region7: #{tpu_custom_call.1} parent=1 // pred_check_branch
      %11 = sbr.rel (0) target = $region9
    $region8: #{tpu_custom_call.1} parent=1 // pred_region
      _
    $region9: #{tpu_custom_call.1} parent=1 // pred_fallthru
      _
    %v12 = vld [vmem:[%s0] sm:$0xff]
    %v13 = vld [vmem:[%s1] sm:$0x1]
    %15 = vset.pattern.permute.xlu0 0
    %16 = vperm.xlu0 %15, %v12
    %v17 = vpop.permute.xlu0 %16
    %v20 = vlaneseq
    %v21 = vshrl.u32 %v20, 7
    %v22 = vsub.s32 0, %v21
    %v23 = vrot.slane %v13, %v22
    %v25 = vmul.f32 %v17, %v23
    %v26 = vand.u32 2147483647, %v25
    %vm27 = vcmp.le.f32.partialorder %v26, 0.7853982
    %vm28 = vcmp.lt.s32.totalorder %v25, 0
    %v29 = vand.u32 %v25, 2139095040
    %v30 = vshrl.u32 %v29, 23
    %v31 = vsub.s32 %v30, 127
    %v32 = vand.u32 2147483647, %v25
    %v33 = vand.u32 %v32, 8388607
    %v34 = vor.u32 %v33, 8388608
    %v35 = vsub.s32 0, %v34
    %v36 = vadd.s32 %v31, 1
    %vm37 = vcmp.gt.s32.totalorder %v36, 0
    %v38 = vsel %vm37, %v36, 0
    %v39 = vshrl.u32 %v38, 5
    %v40 = vand.u32 %v38, 31
    %v41 = vsub.s32 32, %v40
    %v42 = vshrl.u32 683565275, %v41
    %v43 = vshll.u32 683565275, %v40
    %v44 = vshrl.u32 2475754826, %v41
    %v45 = vor.u32 %v43, %v44
    %v46 = vshll.u32 2475754826, %v40
    %v47 = vshrl.u32 2131351028, %v41
    %v48 = vor.u32 %v46, %v47
    %v49 = vshll.u32 2131351028, %v40
    %v50 = vshrl.u32 2102212464, %v41
    %v51 = vor.u32 %v49, %v50
    %v52 = vshll.u32 2102212464, %v40
    %v53 = vshrl.u32 920167782, %v41
    %v54 = vor.u32 %v52, %v53
    %v55 = vshll.u32 920167782, %v40
    %v56 = vshrl.u32 1326507024, %v41
    %v57 = vor.u32 %v55, %v56
    %vm58 = vcmp.lt.s32.totalorder %v39, 1
    %vm59 = vcmp.lt.s32.totalorder %v39, 2
    %vm60 = vcmp.lt.s32.totalorder %v39, 3
    %vm61 = vcmp.lt.s32.totalorder %v39, 4
    %v62 = vsel %vm58, %v42, %v45
    %v63 = vsel %vm61, %v51, 2102212464
    %v64 = vsel %vm60, %v48, %v63
    %v65 = vsel %vm59, %v62, %v64
    %v66 = vsel %vm58, %v45, %v48
    %v67 = vsel %vm61, %v54, 920167782
    %v68 = vsel %vm60, %v51, %v67
    %v69 = vsel %vm59, %v66, %v68
    %v70 = vsel %vm58, %v48, %v51
    %v71 = vsel %vm61, %v57, 1326507024
    %v72 = vsel %vm60, %v54, %v71
    %v73 = vsel %vm59, %v70, %v72
    %v74 = vshll.u32 %v34, 8
    %v75 = vmul.u32.u64.compose %v74, %v73
    %v76 = vextract.low.u32 %v75
    %v77 = vextract.high.u32 %v75
    %v78 = vmul.u32.u64.compose %v74, %v69
    %v79 = vextract.low.u32 %v78
    %v80 = vextract.high.u32 %v78
    %v81 = vmul.u32 %v74, %v65
    %v82 = vadd.s32 %v77, %v79
    %vm83 = vc.u32 %v77, %v79
    %v84 = vadd.s32 %v80, 1
    %v85 = vsel %vm83, %v84, %v80
    %v86 = vadd.s32 %v81, %v85
    %v87 = vadd.s32 %v86, 536870912
    %v88 = vshrl.u32 %v87, 30
    %v89 = vshll.u32 %v88, 30
    %v90 = vsub.s32 %v86, %v89
    %vm91 = vcmp.lt.s32.totalorder %v90, 0
    %v92 = vsub.s32 0, %v90
    %v93 = vsel %vm91, %v92, %v90
    %v94 = vclz %v93
    %v95 = vsub.s32 %v94, 2
    %vm96 = vcmp.gt.s32.totalorder 0, %v95
    %v97 = vsel %vm96, 0, %v95
    %v98 = vsub.s32 32, %v97
    %v99 = vshll.u32 %v90, %v97
    %v100 = vshrl.u32 %v82, %v98
    %v101 = vor.u32 %v99, %v100
    %v102 = vsub.s32 4294967266, %v97
    %v103 = vadd.s32 %v102, 127
    %v104 = vshll.u32 %v103, 23
    %v105 = vor.u32 4788187, %v104
    %v106 = vand.u32 2147483647, %v105
    %v108 = vcvt.s32.f32 %v101
    %v109 = vmul.f32 %v108, %v106
    %v110 = vxor.u32 %v109, 2147483648
    %v111 = vsel %vm28, %v110, %v109
    %v112 = vsub.s32 4, %v88
    %v113 = vsel %vm28, %v112, %v88
    %v114 = vsel %vm27, %v25, %v111
    %v115 = vsel %vm27, 0, %v113
    %v116 = vcosq.f32.pop %v114
    %v117 = vsinq.f32.pop %v114
    %vm118 = vweird.f32 %v25
    %v119 = vadd.s32 %v115, 3
    %v120 = vand.u32 %v119, 3
    %vm121 = vcmp.lt.s32.totalorder %v120, 2
    %vm122 = vcmp.eq.s32.totalorder %v120, 0
    %v123 = vxor.u32 %v117, 2147483648
    %v124 = vsel %vm122, %v116, %v123
    %vm125 = vcmp.eq.s32.totalorder %v120, 2
    %v126 = vxor.u32 %v116, 2147483648
    %v127 = vsel %vm125, %v126, %v117
    %v128 = vsel %vm121, %v124, %v127
    %v129 = vsel %vm118, nan, %v128
    %v130 = vand.u32 2147483647, %v25
    %vm131 = vcmp.le.f32.partialorder %v130, 0.7853982
    %vm132 = vcmp.lt.s32.totalorder %v25, 0
    %v133 = vand.u32 %v25, 2139095040
    %v134 = vshrl.u32 %v133, 23
    %v135 = vsub.s32 %v134, 127
    %v136 = vand.u32 2147483647, %v25
    %v137 = vand.u32 %v136, 8388607
    %v138 = vor.u32 %v137, 8388608
    %v139 = vsub.s32 0, %v138
    %v140 = vadd.s32 %v135, 1
    %vm141 = vcmp.gt.s32.totalorder %v140, 0
    %v142 = vsel %vm141, %v140, 0
    %v143 = vshrl.u32 %v142, 5
    %v144 = vand.u32 %v142, 31
    %v145 = vsub.s32 32, %v144
    %v146 = vshrl.u32 683565275, %v145
    %v147 = vshll.u32 683565275, %v144
    %v148 = vshrl.u32 2475754826, %v145
    %v149 = vor.u32 %v147, %v148
    %v150 = vshll.u32 2475754826, %v144
    %v151 = vshrl.u32 2131351028, %v145
    %v152 = vor.u32 %v150, %v151
    %v153 = vshll.u32 2131351028, %v144
    %v154 = vshrl.u32 2102212464, %v145
    %v155 = vor.u32 %v153, %v154
    %v156 = vshll.u32 2102212464, %v144
    %v157 = vshrl.u32 920167782, %v145
    %v158 = vor.u32 %v156, %v157
    %v159 = vshll.u32 920167782, %v144
    %v160 = vshrl.u32 1326507024, %v145
    %v161 = vor.u32 %v159, %v160
    %vm162 = vcmp.lt.s32.totalorder %v143, 1
    %vm163 = vcmp.lt.s32.totalorder %v143, 2
    %vm164 = vcmp.lt.s32.totalorder %v143, 3
    %vm165 = vcmp.lt.s32.totalorder %v143, 4
    %v166 = vsel %vm162, %v146, %v149
    %v167 = vsel %vm165, %v155, 2102212464
    %v168 = vsel %vm164, %v152, %v167
    %v169 = vsel %vm163, %v166, %v168
    %v170 = vsel %vm162, %v149, %v152
    %v171 = vsel %vm165, %v158, 920167782
    %v172 = vsel %vm164, %v155, %v171
    %v173 = vsel %vm163, %v170, %v172
    %v174 = vsel %vm162, %v152, %v155
    %v175 = vsel %vm165, %v161, 1326507024
    %v176 = vsel %vm164, %v158, %v175
    %v177 = vsel %vm163, %v174, %v176
    %v178 = vshll.u32 %v138, 8
    %v179 = vmul.u32.u64.compose %v178, %v177
    %v180 = vextract.low.u32 %v179
    %v181 = vextract.high.u32 %v179
    %v182 = vmul.u32.u64.compose %v178, %v173
    %v183 = vextract.low.u32 %v182
    %v184 = vextract.high.u32 %v182
    %v185 = vmul.u32 %v178, %v169
    %v186 = vadd.s32 %v181, %v183
    %vm187 = vc.u32 %v181, %v183
    %v188 = vadd.s32 %v184, 1
    %v189 = vsel %vm187, %v188, %v184
    %v190 = vadd.s32 %v185, %v189
    %v191 = vadd.s32 %v190, 536870912
    %v192 = vshrl.u32 %v191, 30
    %v193 = vshll.u32 %v192, 30
    %v194 = vsub.s32 %v190, %v193
    %vm195 = vcmp.lt.s32.totalorder %v194, 0
    %v196 = vsub.s32 0, %v194
    %v197 = vsel %vm195, %v196, %v194
    %v198 = vclz %v197
    %v199 = vsub.s32 %v198, 2
    %vm200 = vcmp.gt.s32.totalorder 0, %v199
    %v201 = vsel %vm200, 0, %v199
    %v202 = vsub.s32 32, %v201
    %v203 = vshll.u32 %v194, %v201
    %v204 = vshrl.u32 %v186, %v202
    %v205 = vor.u32 %v203, %v204
    %v206 = vsub.s32 4294967266, %v201
    %v207 = vadd.s32 %v206, 127
    %v208 = vshll.u32 %v207, 23
    %v209 = vor.u32 4788187, %v208
    %v210 = vand.u32 2147483647, %v209
    %v212 = vcvt.s32.f32 %v205
    %v213 = vmul.f32 %v212, %v210
    %v214 = vxor.u32 %v213, 2147483648
    %v215 = vsel %vm132, %v214, %v213
    %v216 = vsub.s32 4, %v192
    %v217 = vsel %vm132, %v216, %v192
    %v218 = vsel %vm131, %v25, %v215
    %v219 = vsel %vm131, 0, %v217
    %v220 = vcosq.f32.pop %v218
    %v221 = vsinq.f32.pop %v218
    %vm222 = vweird.f32 %v25
    %v223 = vand.u32 %v219, 3
    %vm224 = vcmp.lt.s32.totalorder %v223, 2
    %vm225 = vcmp.eq.s32.totalorder %v223, 0
    %v226 = vxor.u32 %v221, 2147483648
    %v227 = vsel %vm225, %v220, %v226
    %vm228 = vcmp.eq.s32.totalorder %v223, 2
    %v229 = vxor.u32 %v220, 2147483648
    %v230 = vsel %vm228, %v229, %v221
    %v231 = vsel %vm224, %v227, %v230
    %v232 = vsel %vm222, nan, %v231
    %234 = vrot.lane.b32.xlu0 %v232, 4
    %v235 = vpop.permute.xlu0 %234
    %vm237 = vcmask 31744
    %v238 = vsel %vm237, %v129, %v235
    %vm239 = vcmask 64512
    %240 = vst.msk [vmem:[#allocation2] sm:$0xff] %vm239, %v238
    // Predicated region
    $region10: #{tpu_custom_call.1} parent=1 // pred_check
      _
    $region11: #{tpu_custom_call.1} parent=1 // pred_check_branch
      %242 = sbr.rel (0) target = $region13
    $region12: #{tpu_custom_call.1} parent=1 // pred_region
      %s244 = ssub.s32 128, 128
      %245 = vsyncadd [#allocation3], %s244
      %s247 = sshll.u32 [#allocation2], 4
      %s248 = int_to_ptr.vmem [resolvable:$true] %s247
      %250 = dma.vmem_to_hbm [thread:$0]  %s248, 128, %s2, [#allocation3]
    $region13: #{tpu_custom_call.1} parent=1 // pred_fallthru
      _
    // Predicated region
    $region14: #{tpu_custom_call.1} parent=1 // pred_check
      _
    $region15: #{tpu_custom_call.1} parent=1 // pred_check_branch
      %252 = sbr.rel (0) target = $region17
    $region16: #{tpu_custom_call.1} parent=1 // pred_region
      %253 = dma.done [#allocation3], 128
    $region17: #{tpu_custom_call.1} parent=1 // pred_fallthru
      _
    %254 = vsyncpa [#allocation3], 1

</llo_original>
